<compile_context>
chip_gen: v7x
topology: tpu7x:2x2x1
jax: 0.10.0
libtpu: 0.0.40
codegen_flags: <defaults>
</compile_context>

<pallas_src>
import jax
import jax.numpy as jnp
from jax.experimental import pallas as pl
from jax.experimental.pallas import tpu as pltpu


def _make_kernel(seq, batch, in_sz, hid):
    assert in_sz == 2 and hid == 2, "specialized for nn.RNN(2, 2, 1)"
    SB = seq * batch
    P = SB + 2 * batch          # start of the parameter rows in the packed operand

    def kernel(p_ref, y_ref):
        # ---- unpack the single packed operand (static 2D slices) -------------
        x2 = p_ref[0:SB, :]                        # (seq*batch, 2) flattened inputs
        h = p_ref[SB:SB + batch, :]                # (batch, 2)  h0
        g = p_ref[SB + batch:SB + 2 * batch, :]    # (batch, 2)  lane-swapped h0

        a0 = p_ref[P + 0:P + 1, :]                 # W_ih^T row 0          (1, 2)
        a1 = p_ref[P + 1:P + 2, :]                 # W_ih^T row 1
        a0s = p_ref[P + 2:P + 3, :]                # swapped W_ih^T row 0
        a1s = p_ref[P + 3:P + 4, :]                # swapped W_ih^T row 1
        bias = p_ref[P + 4:P + 5, :]               # b_ih + b_hh
        bias_s = p_ref[P + 5:P + 6, :]             # swapped bias

        # Recurrent-weight rows, broadcast ONCE (hoisted out of the time loop).
        wd = jnp.broadcast_to(p_ref[P + 6:P + 7, :], (batch, hid))    # diag(W_hh)
        ws = jnp.broadcast_to(p_ref[P + 7:P + 8, :], (batch, hid))    # off-diag(W_hh)
        wds = jnp.broadcast_to(p_ref[P + 8:P + 9, :], (batch, hid))   # swapped diag
        wss = jnp.broadcast_to(p_ref[P + 9:P + 10, :], (batch, hid))  # swapped off-diag

        # ---- input projection: hoisted off the serial chain (pure VPU) -------
        x0 = x2[:, 0:1]
        x1 = x2[:, 1:2]
        xp = x0 * a0 + x1 * a1 + bias              # (seq*batch, 2) = x @ W_ih^T + b
        xps = x0 * a0s + x1 * a1s + bias_s         # lane-swapped projection

        xp_t = [xp[t * batch:(t + 1) * batch, :] for t in range(seq)]
        xps_t = [xps[t * batch:(t + 1) * batch, :] for t in range(seq)]

        # ---- recurrence: 2 FMAs + tanh per step, no cross-lane ops -----------
        # g tracks swap(h), so the off-diagonal W_hh contribution is elementwise.
        ys = []
        for t in range(seq):                       # static unroll (seq is trace-time)
            h_new = jnp.tanh(xp_t[t] + h * wd + g * ws)
            if t + 1 < seq:                        # g not needed after the last step
                g = jnp.tanh(xps_t[t] + g * wds + h * wss)
            h = h_new
            ys.append(h)

        # One coalesced 2D store (4 contiguous padded tiles).
        y_ref[...] = jnp.concatenate(ys, axis=0)

    return kernel


def rnn_forward(x, h0, w_ih, w_hh, b_ih, b_hh):
    """Mirrors net_RNN.forward((x, h0)) -> (output, h_n)."""
    seq, batch, in_sz = x.shape
    hid = w_ih.shape[0]
    f32 = jnp.float32

    w_ih_f = w_ih.astype(f32)                  # (hid, in)
    w_hh_f = w_hh.astype(f32)                  # (hid, hid)
    bias = (b_ih + b_hh).astype(f32)           # (hid,)  folded bias

    a0 = w_ih_f[:, 0]                          # W_ih^T row 0
    a1 = w_ih_f[:, 1]                          # W_ih^T row 1
    wd = jnp.stack([w_hh_f[0, 0], w_hh_f[1, 1]])   # diagonal coefficients of W_hh
    ws = jnp.stack([w_hh_f[0, 1], w_hh_f[1, 0]])   # off-diagonal coefficients

    h0_2d = h0.reshape(batch, hid).astype(f32)

    param_rows = jnp.stack(
        [a0, a1, a0[::-1], a1[::-1], bias, bias[::-1],
         wd, ws, wd[::-1], ws[::-1]], axis=0)                  # (10, hid)

    # Single packed operand: x rows, h0, swapped h0, parameter rows (all width hid).
    packed = jnp.concatenate(
        [x.reshape(seq * batch, in_sz).astype(f32),
         h0_2d,
         h0_2d[:, ::-1],
         param_rows],
        axis=0)                                                # (seq*batch + 2*batch + 10, hid)

    vmem = pl.BlockSpec(memory_space=pltpu.MemorySpace.VMEM)

    flops = 2 * 2 * seq * batch * hid * (in_sz + hid)          # dual (h, g) chains
    transcendentals = 2 * seq * batch * hid
    bytes_accessed = 4 * (packed.size + seq * batch * hid)

    y2d = pl.pallas_call(
        _make_kernel(seq, batch, in_sz, hid),
        out_shape=jax.ShapeDtypeStruct((seq * batch, hid), f32),
        in_specs=[vmem],
        out_specs=vmem,
        cost_estimate=pl.CostEstimate(
            flops=flops,
            transcendentals=transcendentals,
            bytes_accessed=bytes_accessed),
    )(packed)

    y = y2d.reshape(seq, batch, hid)
    h_n = y[seq - 1:seq]        # final hidden state == last output row for 1-layer RNN
    return y, h_n


if __name__ == "__main__":
    # Module: nn.RNN(2, 2, 1) -> input_size=2, hidden_size=2, num_layers=1.
    SEQ, BATCH, IN_SZ, HID = 8, 4, 2, 2

    key = jax.random.PRNGKey(0)
    kx, kh, k1, k2, k3, k4 = jax.random.split(key, 6)

    # Example inputs (time-major, like PyTorch default).
    x = jax.random.normal(kx, (SEQ, BATCH, IN_SZ), dtype=jnp.float32)
    h0 = jax.random.normal(kh, (1, BATCH, HID), dtype=jnp.float32)

    # PyTorch-style uniform(-1/sqrt(H), 1/sqrt(H)) parameter init.
    bound = 1.0 / jnp.sqrt(jnp.float32(HID))
    w_ih = jax.random.uniform(k1, (HID, IN_SZ), jnp.float32, -bound, bound)
    w_hh = jax.random.uniform(k2, (HID, HID), jnp.float32, -bound, bound)
    b_ih = jax.random.uniform(k3, (HID,), jnp.float32, -bound, bound)
    b_hh = jax.random.uniform(k4, (HID,), jnp.float32, -bound, bound)

    out, h_n = rnn_forward(x, h0, w_ih, w_hh, b_ih, b_hh)
    jax.block_until_ready((out, h_n))

    # Pure-JAX reference check of the recurrence.
    def ref(x, h0):
        h = h0[0]
        ys = []
        for t in range(x.shape[0]):
            h = jnp.tanh(x[t] @ w_ih.T + b_ih + h @ w_hh.T + b_hh)
            ys.append(h)
        return jnp.stack(ys), h[None]

    y_ref, hn_ref = ref(x, h0)
    assert out.shape == (SEQ, BATCH, HID) and h_n.shape == (1, BATCH, HID)
    assert jnp.allclose(out, y_ref, atol=1e-5, rtol=1e-5), "output mismatch"
    assert jnp.allclose(h_n, hn_ref, atol=1e-5, rtol=1e-5), "h_n mismatch"

    print("KERNEL_OK")
</pallas_src>

<mosaic_0001>
module attributes {stable_mosaic.version = 11 : i64} {
  func.func @kernel(%arg0: memref<50x2xf32, #tpu.memory_space<vmem>>, %arg1: memref<32x2xf32, #tpu.memory_space<vmem>>) attributes {dimension_semantics = [], scalar_prefetch = 0 : i64, scratch_operands = 0 : i64, tpu.core_type = #tpu.core_type<tc>} {
    %c0 = arith.constant 0 : index
    %c0_0 = arith.constant 0 : index
    %0 = vector.load %arg0[%c0, %c0_0] : memref<50x2xf32, #tpu.memory_space<vmem>>, vector<32x2xf32>
    %c32 = arith.constant 32 : index
    %c0_1 = arith.constant 0 : index
    %1 = vector.load %arg0[%c32, %c0_1] : memref<50x2xf32, #tpu.memory_space<vmem>>, vector<4x2xf32>
    %c36 = arith.constant 36 : index
    %c0_2 = arith.constant 0 : index
    %2 = vector.load %arg0[%c36, %c0_2] : memref<50x2xf32, #tpu.memory_space<vmem>>, vector<4x2xf32>
    %c40 = arith.constant 40 : index
    %c0_3 = arith.constant 0 : index
    %3 = vector.load %arg0[%c40, %c0_3] : memref<50x2xf32, #tpu.memory_space<vmem>>, vector<1x2xf32>
    %c41 = arith.constant 41 : index
    %c0_4 = arith.constant 0 : index
    %4 = vector.load %arg0[%c41, %c0_4] : memref<50x2xf32, #tpu.memory_space<vmem>>, vector<1x2xf32>
    %c42 = arith.constant 42 : index
    %c0_5 = arith.constant 0 : index
    %5 = vector.load %arg0[%c42, %c0_5] : memref<50x2xf32, #tpu.memory_space<vmem>>, vector<1x2xf32>
    %c43 = arith.constant 43 : index
    %c0_6 = arith.constant 0 : index
    %6 = vector.load %arg0[%c43, %c0_6] : memref<50x2xf32, #tpu.memory_space<vmem>>, vector<1x2xf32>
    %c44 = arith.constant 44 : index
    %c0_7 = arith.constant 0 : index
    %7 = vector.load %arg0[%c44, %c0_7] : memref<50x2xf32, #tpu.memory_space<vmem>>, vector<1x2xf32>
    %c45 = arith.constant 45 : index
    %c0_8 = arith.constant 0 : index
    %8 = vector.load %arg0[%c45, %c0_8] : memref<50x2xf32, #tpu.memory_space<vmem>>, vector<1x2xf32>
    %c46 = arith.constant 46 : index
    %c0_9 = arith.constant 0 : index
    %9 = vector.load %arg0[%c46, %c0_9] : memref<50x2xf32, #tpu.memory_space<vmem>>, vector<1x2xf32>
    %10 = vector.shape_cast %9 : vector<1x2xf32> to vector<1x2xf32>
    %11 = vector.broadcast %10 : vector<1x2xf32> to vector<4x2xf32>
    %c47 = arith.constant 47 : index
    %c0_10 = arith.constant 0 : index
    %12 = vector.load %arg0[%c47, %c0_10] : memref<50x2xf32, #tpu.memory_space<vmem>>, vector<1x2xf32>
    %13 = vector.shape_cast %12 : vector<1x2xf32> to vector<1x2xf32>
    %14 = vector.broadcast %13 : vector<1x2xf32> to vector<4x2xf32>
    %c48 = arith.constant 48 : index
    %c0_11 = arith.constant 0 : index
    %15 = vector.load %arg0[%c48, %c0_11] : memref<50x2xf32, #tpu.memory_space<vmem>>, vector<1x2xf32>
    %16 = vector.shape_cast %15 : vector<1x2xf32> to vector<1x2xf32>
    %17 = vector.broadcast %16 : vector<1x2xf32> to vector<4x2xf32>
    %c49 = arith.constant 49 : index
    %c0_12 = arith.constant 0 : index
    %18 = vector.load %arg0[%c49, %c0_12] : memref<50x2xf32, #tpu.memory_space<vmem>>, vector<1x2xf32>
    %19 = vector.shape_cast %18 : vector<1x2xf32> to vector<1x2xf32>
    %20 = vector.broadcast %19 : vector<1x2xf32> to vector<4x2xf32>
    %21 = vector.extract_strided_slice %0 {offsets = [0, 0], sizes = [32, 1], strides = [1, 1]} : vector<32x2xf32> to vector<32x1xf32>
    %22 = vector.extract_strided_slice %0 {offsets = [0, 1], sizes = [32, 1], strides = [1, 1]} : vector<32x2xf32> to vector<32x1xf32>
    %23 = vector.broadcast %21 : vector<32x1xf32> to vector<32x2xf32>
    %24 = vector.broadcast %3 : vector<1x2xf32> to vector<32x2xf32>
    %25 = arith.mulf %23, %24 : vector<32x2xf32>
    %26 = vector.broadcast %22 : vector<32x1xf32> to vector<32x2xf32>
    %27 = vector.broadcast %4 : vector<1x2xf32> to vector<32x2xf32>
    %28 = arith.mulf %26, %27 : vector<32x2xf32>
    %29 = arith.addf %25, %28 : vector<32x2xf32>
    %30 = vector.broadcast %7 : vector<1x2xf32> to vector<32x2xf32>
    %31 = arith.addf %29, %30 : vector<32x2xf32>
    %32 = vector.broadcast %21 : vector<32x1xf32> to vector<32x2xf32>
    %33 = vector.broadcast %5 : vector<1x2xf32> to vector<32x2xf32>
    %34 = arith.mulf %32, %33 : vector<32x2xf32>
    %35 = vector.broadcast %22 : vector<32x1xf32> to vector<32x2xf32>
    %36 = vector.broadcast %6 : vector<1x2xf32> to vector<32x2xf32>
    %37 = arith.mulf %35, %36 : vector<32x2xf32>
    %38 = arith.addf %34, %37 : vector<32x2xf32>
    %39 = vector.broadcast %8 : vector<1x2xf32> to vector<32x2xf32>
    %40 = arith.addf %38, %39 : vector<32x2xf32>
    %41 = vector.extract_strided_slice %31 {offsets = [0, 0], sizes = [4, 2], strides = [1, 1]} : vector<32x2xf32> to vector<4x2xf32>
    %42 = vector.extract_strided_slice %31 {offsets = [4, 0], sizes = [4, 2], strides = [1, 1]} : vector<32x2xf32> to vector<4x2xf32>
    %43 = vector.extract_strided_slice %31 {offsets = [8, 0], sizes = [4, 2], strides = [1, 1]} : vector<32x2xf32> to vector<4x2xf32>
    %44 = vector.extract_strided_slice %31 {offsets = [12, 0], sizes = [4, 2], strides = [1, 1]} : vector<32x2xf32> to vector<4x2xf32>
    %45 = vector.extract_strided_slice %31 {offsets = [16, 0], sizes = [4, 2], strides = [1, 1]} : vector<32x2xf32> to vector<4x2xf32>
    %46 = vector.extract_strided_slice %31 {offsets = [20, 0], sizes = [4, 2], strides = [1, 1]} : vector<32x2xf32> to vector<4x2xf32>
    %47 = vector.extract_strided_slice %31 {offsets = [24, 0], sizes = [4, 2], strides = [1, 1]} : vector<32x2xf32> to vector<4x2xf32>
    %48 = vector.extract_strided_slice %31 {offsets = [28, 0], sizes = [4, 2], strides = [1, 1]} : vector<32x2xf32> to vector<4x2xf32>
    %49 = vector.extract_strided_slice %40 {offsets = [0, 0], sizes = [4, 2], strides = [1, 1]} : vector<32x2xf32> to vector<4x2xf32>
    %50 = vector.extract_strided_slice %40 {offsets = [4, 0], sizes = [4, 2], strides = [1, 1]} : vector<32x2xf32> to vector<4x2xf32>
    %51 = vector.extract_strided_slice %40 {offsets = [8, 0], sizes = [4, 2], strides = [1, 1]} : vector<32x2xf32> to vector<4x2xf32>
    %52 = vector.extract_strided_slice %40 {offsets = [12, 0], sizes = [4, 2], strides = [1, 1]} : vector<32x2xf32> to vector<4x2xf32>
    %53 = vector.extract_strided_slice %40 {offsets = [16, 0], sizes = [4, 2], strides = [1, 1]} : vector<32x2xf32> to vector<4x2xf32>
    %54 = vector.extract_strided_slice %40 {offsets = [20, 0], sizes = [4, 2], strides = [1, 1]} : vector<32x2xf32> to vector<4x2xf32>
    %55 = vector.extract_strided_slice %40 {offsets = [24, 0], sizes = [4, 2], strides = [1, 1]} : vector<32x2xf32> to vector<4x2xf32>
    %56 = arith.mulf %1, %11 : vector<4x2xf32>
    %57 = arith.addf %41, %56 : vector<4x2xf32>
    %58 = arith.mulf %2, %14 : vector<4x2xf32>
    %59 = arith.addf %57, %58 : vector<4x2xf32>
    %60 = math.tanh %59 : vector<4x2xf32>
    %61 = arith.mulf %2, %17 : vector<4x2xf32>
    %62 = arith.addf %49, %61 : vector<4x2xf32>
    %63 = arith.mulf %1, %20 : vector<4x2xf32>
    %64 = arith.addf %62, %63 : vector<4x2xf32>
    %65 = math.tanh %64 : vector<4x2xf32>
    %66 = arith.mulf %60, %11 : vector<4x2xf32>
    %67 = arith.addf %42, %66 : vector<4x2xf32>
    %68 = arith.mulf %65, %14 : vector<4x2xf32>
    %69 = arith.addf %67, %68 : vector<4x2xf32>
    %70 = math.tanh %69 : vector<4x2xf32>
    %71 = arith.mulf %65, %17 : vector<4x2xf32>
    %72 = arith.addf %50, %71 : vector<4x2xf32>
    %73 = arith.mulf %60, %20 : vector<4x2xf32>
    %74 = arith.addf %72, %73 : vector<4x2xf32>
    %75 = math.tanh %74 : vector<4x2xf32>
    %76 = arith.mulf %70, %11 : vector<4x2xf32>
    %77 = arith.addf %43, %76 : vector<4x2xf32>
    %78 = arith.mulf %75, %14 : vector<4x2xf32>
    %79 = arith.addf %77, %78 : vector<4x2xf32>
    %80 = math.tanh %79 : vector<4x2xf32>
    %81 = arith.mulf %75, %17 : vector<4x2xf32>
    %82 = arith.addf %51, %81 : vector<4x2xf32>
    %83 = arith.mulf %70, %20 : vector<4x2xf32>
    %84 = arith.addf %82, %83 : vector<4x2xf32>
    %85 = math.tanh %84 : vector<4x2xf32>
    %86 = arith.mulf %80, %11 : vector<4x2xf32>
    %87 = arith.addf %44, %86 : vector<4x2xf32>
    %88 = arith.mulf %85, %14 : vector<4x2xf32>
    %89 = arith.addf %87, %88 : vector<4x2xf32>
    %90 = math.tanh %89 : vector<4x2xf32>
    %91 = arith.mulf %85, %17 : vector<4x2xf32>
    %92 = arith.addf %52, %91 : vector<4x2xf32>
    %93 = arith.mulf %80, %20 : vector<4x2xf32>
    %94 = arith.addf %92, %93 : vector<4x2xf32>
    %95 = math.tanh %94 : vector<4x2xf32>
    %96 = arith.mulf %90, %11 : vector<4x2xf32>
    %97 = arith.addf %45, %96 : vector<4x2xf32>
    %98 = arith.mulf %95, %14 : vector<4x2xf32>
    %99 = arith.addf %97, %98 : vector<4x2xf32>
    %100 = math.tanh %99 : vector<4x2xf32>
    %101 = arith.mulf %95, %17 : vector<4x2xf32>
    %102 = arith.addf %53, %101 : vector<4x2xf32>
    %103 = arith.mulf %90, %20 : vector<4x2xf32>
    %104 = arith.addf %102, %103 : vector<4x2xf32>
    %105 = math.tanh %104 : vector<4x2xf32>
    %106 = arith.mulf %100, %11 : vector<4x2xf32>
    %107 = arith.addf %46, %106 : vector<4x2xf32>
    %108 = arith.mulf %105, %14 : vector<4x2xf32>
    %109 = arith.addf %107, %108 : vector<4x2xf32>
    %110 = math.tanh %109 : vector<4x2xf32>
    %111 = arith.mulf %105, %17 : vector<4x2xf32>
    %112 = arith.addf %54, %111 : vector<4x2xf32>
    %113 = arith.mulf %100, %20 : vector<4x2xf32>
    %114 = arith.addf %112, %113 : vector<4x2xf32>
    %115 = math.tanh %114 : vector<4x2xf32>
    %116 = arith.mulf %110, %11 : vector<4x2xf32>
    %117 = arith.addf %47, %116 : vector<4x2xf32>
    %118 = arith.mulf %115, %14 : vector<4x2xf32>
    %119 = arith.addf %117, %118 : vector<4x2xf32>
    %120 = math.tanh %119 : vector<4x2xf32>
    %121 = arith.mulf %115, %17 : vector<4x2xf32>
    %122 = arith.addf %55, %121 : vector<4x2xf32>
    %123 = arith.mulf %110, %20 : vector<4x2xf32>
    %124 = arith.addf %122, %123 : vector<4x2xf32>
    %125 = math.tanh %124 : vector<4x2xf32>
    %126 = arith.mulf %120, %11 : vector<4x2xf32>
    %127 = arith.addf %48, %126 : vector<4x2xf32>
    %128 = arith.mulf %125, %14 : vector<4x2xf32>
    %129 = arith.addf %127, %128 : vector<4x2xf32>
    %130 = math.tanh %129 : vector<4x2xf32>
    %131 = tpu.concatenate %60, %70, %80, %90, %100, %110, %120, %130 in 0 : vector<4x2xf32>, vector<4x2xf32>, vector<4x2xf32>, vector<4x2xf32>, vector<4x2xf32>, vector<4x2xf32>, vector<4x2xf32>, vector<4x2xf32> -> vector<32x2xf32>
    %c0_13 = arith.constant 0 : index
    %c0_14 = arith.constant 0 : index
    %132 = vector.load %arg1[%c0_13, %c0_14] : memref<32x2xf32, #tpu.memory_space<vmem>>, vector<32x2xf32>
    tpu.vector_store %arg1[%c0_13, %c0_14], %131 {strides = array<i32>} : memref<32x2xf32, #tpu.memory_space<vmem>>, vector<32x2xf32>,
    return
  }
}

</mosaic_0001>

<llo_original>
// kernel: tpu_custom_call.1
$region0: #{tpu_custom_call.1}
  #allocation0 [shape = 'u32[]', space=smem, size = 0x4, offset = 0x4, fixed_abs, tag = 'smem constant byte address 0x4 - core index']
  #allocation1 [shape = 'u32[144,128]{1,0:T(1,128)}', space=vmem, size = 0x12000, scoped, tag = 'internal scratch']
  %s0 = inlined_call_operand.vmem [shape: f32[50,2], index: 0, kind: input, shape index: {}]
  %s1 = inlined_call_operand.vmem [shape: f32[32,2], index: 1, kind: output, shape index: {}]
  %s2 = sld [smem:[#allocation0]]
  $region14: #{tpu_custom_call.1} parent=0
    _
  %s4 = ssub.s32 1, %s2
  %s5 = scalar_select 0, %s4, %s2
  // Predicated region
  $region2: #{tpu_custom_call.1} parent=0 // pred_check
    _
  $region3: #{tpu_custom_call.1} parent=0 // pred_check_branch
    %7 = sbr.rel (0) target = $region5
  $region4: #{tpu_custom_call.1} parent=0 // pred_region
    _
  $region5: #{tpu_custom_call.1} parent=0 // pred_fallthru
    _
  %v8 = vld [vmem:[%s0] sm:$0xff]
  %v9 = vld [vmem:[%s0 + $0x8] sm:$0xff]
  %v10 = vld [vmem:[%s0 + $0x10] sm:$0xff]
  %v11 = vld [vmem:[%s0 + $0x18] sm:$0xff]
  %v12 = vld [vmem:[%s0 + $0x20] sm:$0xf]
  %v13 = vld [vmem:[%s0 + $0x24] sm:$0xf]
  %v14 = vld [vmem:[%s0 + $0x28] sm:$0x1]
  %v15 = vld [vmem:[%s0 + $0x29] sm:$0x1]
  %v16 = vld [vmem:[%s0 + $0x2a] sm:$0x1]
  %v17 = vld [vmem:[%s0 + $0x2b] sm:$0x1]
  %v18 = vld [vmem:[%s0 + $0x2c] sm:$0x1]
  %v19 = vld [vmem:[%s0 + $0x2d] sm:$0x1]
  %v20 = vld [vmem:[%s0 + $0x2e] sm:$0x1]
  %v21 = vlaneseq
  %v22 = vshrl.u32 %v21, 7
  %v23 = vsub.s32 0, %v22
  %v24 = vrot.slane %v20, %v23
  %v25 = vld [vmem:[%s0 + $0x2f] sm:$0x1]
  %v26 = vlaneseq
  %v27 = vshrl.u32 %v26, 7
  %v28 = vsub.s32 0, %v27
  %v29 = vrot.slane %v25, %v28
  %v30 = vld [vmem:[%s0 + $0x30] sm:$0x1]
  %v31 = vlaneseq
  %v32 = vshrl.u32 %v31, 7
  %v33 = vsub.s32 0, %v32
  %v34 = vrot.slane %v30, %v33
  %v35 = vld [vmem:[%s0 + $0x31] sm:$0x1]
  %v36 = vlaneseq
  %v37 = vshrl.u32 %v36, 7
  %v38 = vsub.s32 0, %v37
  %v39 = vrot.slane %v35, %v38
  %41 = vset.pattern.permute.xlu0 0
  %42 = vperm.xlu0 %41, %v8
  %v43 = vpop.permute.xlu0 %42
  %46 = vset.pattern.permute.xlu0 0
  %47 = vperm.xlu0 %46, %v9
  %v48 = vpop.permute.xlu0 %47
  %51 = vset.pattern.permute.xlu0 0
  %52 = vperm.xlu0 %51, %v10
  %v53 = vpop.permute.xlu0 %52
  %56 = vset.pattern.permute.xlu0 0
  %57 = vperm.xlu0 %56, %v11
  %v58 = vpop.permute.xlu0 %57
  %v60 = vlaneseq
  %v61 = vshrl.u32 %v60, 7
  %v62 = vsub.s32 0, %v61
  %v63 = vrot.slane %v14, %v62
  %v64 = vmul.f32 %v43, %v63
  %v65 = vmul.f32 %v48, %v63
  %v66 = vmul.f32 %v53, %v63
  %v67 = vmul.f32 %v58, %v63
  %68 = vset.pattern.permute.xlu0 1
  %69 = vperm.xlu0 %68, %v8
  %v70 = vpop.permute.xlu0 %69
  %72 = vset.pattern.permute.xlu0 1
  %73 = vperm.xlu0 %72, %v9
  %v74 = vpop.permute.xlu0 %73
  %76 = vset.pattern.permute.xlu0 1
  %77 = vperm.xlu0 %76, %v10
  %v78 = vpop.permute.xlu0 %77
  %80 = vset.pattern.permute.xlu0 1
  %81 = vperm.xlu0 %80, %v11
  %v82 = vpop.permute.xlu0 %81
  %v84 = vlaneseq
  %v85 = vshrl.u32 %v84, 7
  %v86 = vsub.s32 0, %v85
  %v87 = vrot.slane %v15, %v86
  %v88 = vmul.f32 %v70, %v87
  %v89 = vmul.f32 %v74, %v87
  %v90 = vmul.f32 %v78, %v87
  %v91 = vmul.f32 %v82, %v87
  %v92 = vadd.f32 %v64, %v88
  %v93 = vadd.f32 %v65, %v89
  %v94 = vadd.f32 %v66, %v90
  %v95 = vadd.f32 %v67, %v91
  %v96 = vlaneseq
  %v97 = vshrl.u32 %v96, 7
  %v98 = vsub.s32 0, %v97
  %v99 = vrot.slane %v18, %v98
  %v100 = vadd.f32 %v92, %v99
  %v101 = vadd.f32 %v93, %v99
  %v102 = vadd.f32 %v94, %v99
  %v103 = vadd.f32 %v95, %v99
  %v104 = vlaneseq
  %v105 = vshrl.u32 %v104, 7
  %v106 = vsub.s32 0, %v105
  %v107 = vrot.slane %v16, %v106
  %v108 = vmul.f32 %v43, %v107
  %v109 = vmul.f32 %v48, %v107
  %v110 = vmul.f32 %v53, %v107
  %v111 = vmul.f32 %v58, %v107
  %v112 = vlaneseq
  %v113 = vshrl.u32 %v112, 7
  %v114 = vsub.s32 0, %v113
  %v115 = vrot.slane %v17, %v114
  %v116 = vmul.f32 %v70, %v115
  %v117 = vmul.f32 %v74, %v115
  %v118 = vmul.f32 %v78, %v115
  %v119 = vmul.f32 %v82, %v115
  %v120 = vadd.f32 %v108, %v116
  %v121 = vadd.f32 %v109, %v117
  %v122 = vadd.f32 %v110, %v118
  %v123 = vadd.f32 %v111, %v119
  %v124 = vlaneseq
  %v125 = vshrl.u32 %v124, 7
  %v126 = vsub.s32 0, %v125
  %v127 = vrot.slane %v19, %v126
  %v128 = vadd.f32 %v120, %v127
  %v129 = vadd.f32 %v121, %v127
  %v130 = vadd.f32 %v122, %v127
  %v131 = vadd.f32 %v123, %v127
  %v132 = vmul.f32 %v12, %v24
  %v133 = vadd.f32 %v100, %v132
  %v134 = vmul.f32 %v13, %v29
  %v135 = vadd.f32 %v133, %v134
  %v136 = vtanh.pop %v135
  %v137 = vmul.f32 %v13, %v34
  %v138 = vadd.f32 %v128, %v137
  %v139 = vmul.f32 %v12, %v39
  %v140 = vadd.f32 %v138, %v139
  %v141 = vtanh.pop %v140
  %v142 = vmul.f32 %v136, %v24
  %v144 = vrot.slane %v142, 4
  %v146 = vadd.f32 %v100, %v144
  %v147 = vmul.f32 %v141, %v29
  %v149 = vrot.slane %v147, 4
  %v151 = vadd.f32 %v146, %v149
  %v152 = vtanh.pop %v151
  %v153 = vmul.f32 %v141, %v34
  %v155 = vrot.slane %v153, 4
  %v157 = vadd.f32 %v128, %v155
  %v158 = vmul.f32 %v136, %v39
  %v160 = vrot.slane %v158, 4
  %v162 = vadd.f32 %v157, %v160
  %v163 = vtanh.pop %v162
  %v164 = vmul.f32 %v152, %v24
  %v166 = vrot.slane %v164, 4
  %v168 = vadd.f32 %v101, %v166
  %v169 = vmul.f32 %v163, %v29
  %v171 = vrot.slane %v169, 4
  %v173 = vadd.f32 %v168, %v171
  %v174 = vtanh.pop %v173
  %v175 = vmul.f32 %v163, %v34
  %v177 = vrot.slane %v175, 4
  %v179 = vadd.f32 %v129, %v177
  %v180 = vmul.f32 %v152, %v39
  %v182 = vrot.slane %v180, 4
  %v184 = vadd.f32 %v179, %v182
  %v185 = vtanh.pop %v184
  %v186 = vmul.f32 %v174, %v24
  %v188 = vrot.slane %v186, 4
  %v190 = vadd.f32 %v101, %v188
  %v191 = vmul.f32 %v185, %v29
  %v193 = vrot.slane %v191, 4
  %v195 = vadd.f32 %v190, %v193
  %v196 = vtanh.pop %v195
  %v197 = vmul.f32 %v185, %v34
  %v199 = vrot.slane %v197, 4
  %v201 = vadd.f32 %v129, %v199
  %v202 = vmul.f32 %v174, %v39
  %v204 = vrot.slane %v202, 4
  %v206 = vadd.f32 %v201, %v204
  %v207 = vtanh.pop %v206
  %v208 = vmul.f32 %v196, %v24
  %v210 = vrot.slane %v208, 4
  %v212 = vadd.f32 %v102, %v210
  %v213 = vmul.f32 %v207, %v29
  %v215 = vrot.slane %v213, 4
  %v217 = vadd.f32 %v212, %v215
  %v218 = vtanh.pop %v217
  %v219 = vmul.f32 %v207, %v34
  %v221 = vrot.slane %v219, 4
  %v223 = vadd.f32 %v130, %v221
  %v224 = vmul.f32 %v196, %v39
  %v226 = vrot.slane %v224, 4
  %v228 = vadd.f32 %v223, %v226
  %v229 = vtanh.pop %v228
  %v230 = vmul.f32 %v218, %v24
  %v232 = vrot.slane %v230, 4
  %v234 = vadd.f32 %v102, %v232
  %v235 = vmul.f32 %v229, %v29
  %v237 = vrot.slane %v235, 4
  %v239 = vadd.f32 %v234, %v237
  %v240 = vtanh.pop %v239
  %v241 = vmul.f32 %v229, %v34
  %v243 = vrot.slane %v241, 4
  %v245 = vadd.f32 %v130, %v243
  %v246 = vmul.f32 %v218, %v39
  %v248 = vrot.slane %v246, 4
  %v250 = vadd.f32 %v245, %v248
  %v251 = vtanh.pop %v250
  %v252 = vmul.f32 %v240, %v24
  %v254 = vrot.slane %v252, 4
  %v256 = vadd.f32 %v103, %v254
  %v257 = vmul.f32 %v251, %v29
  %v259 = vrot.slane %v257, 4
  %v261 = vadd.f32 %v256, %v259
  %v262 = vtanh.pop %v261
  %v263 = vmul.f32 %v251, %v34
  %v265 = vrot.slane %v263, 4
  %v267 = vadd.f32 %v131, %v265
  %v268 = vmul.f32 %v240, %v39
  %v270 = vrot.slane %v268, 4
  %v272 = vadd.f32 %v267, %v270
  %v273 = vtanh.pop %v272
  %v274 = vmul.f32 %v262, %v24
  %v276 = vrot.slane %v274, 4
  %v278 = vadd.f32 %v103, %v276
  %v279 = vmul.f32 %v273, %v29
  %v281 = vrot.slane %v279, 4
  %v283 = vadd.f32 %v278, %v281
  %v284 = vtanh.pop %v283
  %vm285 = vcmask 1043456
  %v286 = vsel %vm285, %v136, %v152
  %v287 = vsel %vm285, %v174, %v196
  %v288 = vsel %vm285, %v218, %v240
  %v289 = vsel %vm285, %v262, %v284
  %vm290 = vcmask 15360
  %291 = vst.msk [vmem:[%s1] sm:$0xff] %vm290, %v286
  %292 = vst.msk [vmem:[%s1 + $0x8] sm:$0xff] %vm290, %v287
  %293 = vst.msk [vmem:[%s1 + $0x10] sm:$0xff] %vm290, %v288
  %294 = vst.msk [vmem:[%s1 + $0x18] sm:$0xff] %vm290, %v289
  // Predicated region
  $region6: #{tpu_custom_call.1} parent=0 // pred_check
    _
  $region7: #{tpu_custom_call.1} parent=0 // pred_check_branch
    %296 = sbr.rel (0) target = $region9
  $region8: #{tpu_custom_call.1} parent=0 // pred_region
    _
  $region9: #{tpu_custom_call.1} parent=0 // pred_fallthru
    _
  // Predicated region
  $region10: #{tpu_custom_call.1} parent=0 // pred_check
    _
  $region11: #{tpu_custom_call.1} parent=0 // pred_check_branch
    %298 = sbr.rel (0) target = $region13
  $region12: #{tpu_custom_call.1} parent=0 // pred_region
    _
  $region13: #{tpu_custom_call.1} parent=0 // pred_fallthru
    _

</llo_original>
